<compile_context>
chip_gen: v7x
topology: tpu7x:2x2x1
jax: 0.10.0
libtpu: 0.0.40
codegen_flags: <defaults>
</compile_context>

<pallas_src>
import math

import jax
import jax.numpy as jnp
from jax.experimental import pallas as pl
from jax.experimental.pallas import tpu as pltpu


def _round_up(x, m):
    return ((x + m - 1) // m) * m


def _cdiv(a, b):
    return -(-a // b)


def _sublane(dtype):
    # Sublane tile per dtype: f32 -> 8, bf16 -> 16, int8/fp8 -> 32.
    return {4: 8, 2: 16, 1: 32}.get(jnp.dtype(dtype).itemsize, 8)


def _largest_divisor_tile(total, quantum, target):
    """Largest multiple of `quantum` dividing `total` that is <= target."""
    units = total // quantum
    t_units = max(1, min(target // quantum, units))
    for u in range(t_units, 0, -1):
        if units % u == 0:
            return u * quantum
    return quantum


def _vmem_cap_bytes():
    # Generation-aware usable VMEM (~85% of physical; headroom for Mosaic
    # internal scratch / semaphores).  v5e/v6e: 128 MiB -> ~108 MiB usable,
    # v7x: 64 MiB -> ~54 MiB usable.
    try:
        phys = int(pltpu.get_tpu_info().vmem_capacity_bytes)
    except Exception:
        phys = 64 * 1024 * 1024  # conservative fallback
    return max(int(phys * 0.85), 16 * 1024 * 1024)


def _linear_kernel(x_ref, w_ref, b_ref, o_ref):
    # Whole-K-resident step: one (tile_m x tile_n) MXU matmul, f32 accumulate.
    y = jnp.dot(x_ref[...], w_ref[...], preferred_element_type=jnp.float32)
    o_ref[...] = (y + b_ref[...]).astype(o_ref.dtype)


def _linear_kernel_ksplit(x_ref, w_ref, b_ref, o_ref, acc_ref):
    # K-split step: accumulate partial products in f32 VMEM scratch; add bias,
    # cast and store only on the last K tile.
    k = pl.program_id(2)

    @pl.when(k == 0)
    def _():
        acc_ref[...] = jnp.zeros_like(acc_ref)

    acc_ref[...] += jnp.dot(x_ref[...], w_ref[...],
                            preferred_element_type=jnp.float32)

    @pl.when(k == pl.num_programs(2) - 1)
    def _():
        o_ref[...] = (acc_ref[...] + b_ref[...]).astype(o_ref.dtype)


def minibatch_linear(x, weight, bias, batch_size, *,
                     tile_m=None, tile_n=None, tile_k=None,
                     compute_dtype=None):
    """MinibatchWrapper(Linear(D_in, D_out), batch_size).forward(x).

    x:      [N, D_in]
    weight: [D_in, D_out]   (transposed vs torch's [out, in] storage)
    bias:   [D_out]

    `batch_size` is kept for API fidelity with MinibatchWrapper; for a pure
    row-wise Linear the minibatch slice + concat is the identity, so the
    compute tile is chosen for the TPU, not from `batch_size`.
    """
    del batch_size  # semantically a no-op for a row-wise module (see docstring)

    out_dtype = x.dtype
    n, d_in = x.shape
    d_out = weight.shape[1]

    # Optional bf16 MXU path: accumulation stays f32, output dtype unchanged.
    if compute_dtype is not None and jnp.dtype(compute_dtype) != jnp.dtype(x.dtype):
        x = x.astype(compute_dtype)
        weight = weight.astype(compute_dtype)
    cdt = x.dtype
    ci = jnp.dtype(cdt).itemsize
    oi = jnp.dtype(out_dtype).itemsize
    sublane = _sublane(cdt)

    # ---- D_out lane padding: only when the pad fraction is small ------------
    if d_out % 128 == 0:
        d_out_p, pad_out = d_out, False
    else:
        pad = _round_up(d_out, 128) - d_out
        if pad * 8 <= d_out:
            # Lane-dense (unmasked) stores are worth the later slice pass.
            d_out_p, pad_out = d_out + pad, True
            weight = jnp.pad(weight, ((0, 0), (0, pad)))
            bias = jnp.pad(bias, ((0, pad),))
        else:
            # Large pad fraction: masked stores beat an extra full-output copy.
            d_out_p, pad_out = d_out, False
    bias2d = bias.astype(jnp.float32).reshape(1, d_out_p)

    # ---- tile selection ------------------------------------------------------
    if d_out_p % 128 == 0:
        tn = _largest_divisor_tile(d_out_p, 128, tile_n if tile_n else 512)
    else:
        tn = d_out_p  # ragged D_out: block must span the full dim (masked vst)

    # K is split only when it divides cleanly into 128-lane chunks (otherwise
    # garbage OOB K columns would feed the accumulator).
    can_split_k = (d_in % 128 == 0) and (d_in > 128)
    if (tile_k is not None and can_split_k and tile_k < d_in
            and tile_k % 128 == 0 and d_in % tile_k == 0):
        tk = tile_k
    else:
        tk = d_in
    # TODO(synk): for huge d_in that is not a multiple of 128, pad K on the host
    # (or mask the ragged K tile in-kernel) instead of keeping it resident.

    tm = tile_m if tile_m else 512
    tm = _round_up(min(tm, _round_up(n, sublane)), sublane)

    cap = _vmem_cap_bytes()

    def _grids(tm_, tn_, tk_):
        return _cdiv(n, tm_), _cdiv(d_out_p, tn_), _cdiv(d_in, tk_)

    def _footprint(tm_, tn_, tk_):
        # Real VMEM footprint: lane/sublane-padded buffers.
        gm_, gn_, gk_ = _grids(tm_, tn_, tk_)
        lane_k = _round_up(tk_, 128)
        lane_n = _round_up(tn_, 128)
        x_bufs = 3 if (gn_ == 1 and gk_ == 1) else 2
        w_bufs = 1 if (gn_ == 1 and gk_ == 1) else 2
        fp = x_bufs * tm_ * lane_k * ci                    # x tiles
        fp += w_bufs * _round_up(tk_, 8) * lane_n * ci     # weight tiles
        fp += 2 * 8 * lane_n * 4                           # bias (f32)
        fp += 2 * tm_ * lane_n * oi                        # output tiles
        if gk_ > 1:
            fp += tm_ * lane_n * 4                         # f32 accumulator
        return fp

    # Shrink to fit: split K first (keeps MXU tiles big), then rows, then cols.
    while _footprint(tm, tn, tk) * 1.15 > cap:
        if can_split_k and tk > 128:
            tk = _largest_divisor_tile(d_in, 128, max(tk // 2, 128))
            continue
        if tm > sublane:
            tm = _round_up(max(tm // 2, sublane), sublane)
            continue
        if d_out_p % 128 == 0 and tn > 128:
            tn = _largest_divisor_tile(d_out_p, 128, tn - 128)
            continue
        break  # minimal tiles reached; let the compiler decide

    gm, gn, gk = _grids(tm, tn, tk)

    # v7x has 2 TensorCores: make sure megacore has >= 2 parallel steps to
    # shard (one extra ~0.35 us step is noise on single-TC v5e/v6e).
    if gm * gn * gk == 1 and n >= 2 * sublane:
        tm = _round_up((n + 1) // 2, sublane)
        gm, gn, gk = _grids(tm, tn, tk)

    # ---- grid order: put the axis whose re-reads cost more HBM bytes outer --
    extra_if_m_outer = (gm - 1) * d_in * d_out_p * ci   # weight re-read cost
    extra_if_n_outer = (gn - 1) * n * d_in * ci         # x re-read cost
    m_outer = extra_if_m_outer <= extra_if_n_outer

    if gk == 1:
        if m_outer:
            grid = (gm, gn)
            x_map = lambda i, j: (i, 0)
            w_map = lambda i, j: (0, j)
            b_map = lambda i, j: (0, j)
            o_map = lambda i, j: (i, j)
        else:
            grid = (gn, gm)
            x_map = lambda j, i: (i, 0)
            w_map = lambda j, i: (0, j)
            b_map = lambda j, i: (0, j)
            o_map = lambda j, i: (i, j)
        dims = ("parallel", "parallel")
        kernel = _linear_kernel
        scratch = ()
    else:
        if m_outer:
            grid = (gm, gn, gk)
            x_map = lambda i, j, k: (i, k)
            w_map = lambda i, j, k: (k, j)
            b_map = lambda i, j, k: (0, j)
            o_map = lambda i, j, k: (i, j)
        else:
            grid = (gn, gm, gk)
            x_map = lambda j, i, k: (i, k)
            w_map = lambda j, i, k: (k, j)
            b_map = lambda j, i, k: (0, j)
            o_map = lambda j, i, k: (i, j)
        dims = ("parallel", "parallel", "arbitrary")
        kernel = _linear_kernel_ksplit
        scratch = (pltpu.VMEM((tm, tn), jnp.float32),)

    # Single-buffer operands whose block index is constant over the whole grid;
    # triple-buffer the x stream when the weight is resident and the grid is long.
    w_resident = (gn == 1 and gk == 1)
    b_resident = (gn == 1)

    x_kwargs = dict(pipeline_mode=pl.Buffered(3)) if (w_resident and gm >= 4) else {}
    w_kwargs = dict(pipeline_mode=pl.Buffered(1)) if w_resident else {}
    b_kwargs = dict(pipeline_mode=pl.Buffered(1)) if b_resident else {}

    x_spec = pl.BlockSpec((tm, tk), x_map, **x_kwargs)
    w_spec = pl.BlockSpec((tk, tn), w_map, **w_kwargs)
    b_spec = pl.BlockSpec((1, tn), b_map, **b_kwargs)
    o_spec = pl.BlockSpec((tm, tn), o_map)

    # VMEM limit: generation-aware cap, footprint-based, no double hedging.
    fp = _footprint(tm, tn, tk)
    vmem_limit = int(min(cap, max(int(fp * 1.5), 32 * 1024 * 1024)))

    # Advisory cost: reflect actual DMA traffic of the chosen grid order.
    if gk == 1:
        x_bytes = (1 if m_outer else gn) * n * d_in * ci
        w_bytes = (gm if m_outer else 1) * d_in * d_out_p * ci
    else:
        x_bytes = gn * n * d_in * ci
        w_bytes = gm * d_in * d_out_p * ci
    cost = pl.CostEstimate(
        flops=2 * n * d_in * d_out_p,
        transcendentals=0,
        bytes_accessed=int(x_bytes + w_bytes + d_out_p * 4 + n * d_out_p * oi),
    )

    out = pl.pallas_call(
        kernel,
        out_shape=jax.ShapeDtypeStruct((n, d_out_p), out_dtype),
        grid_spec=pltpu.PrefetchScalarGridSpec(
            num_scalar_prefetch=0,
            grid=grid,
            in_specs=[x_spec, w_spec, b_spec],
            out_specs=o_spec,
            scratch_shapes=scratch,
        ),
        compiler_params=pltpu.CompilerParams(
            dimension_semantics=dims,
            vmem_limit_bytes=vmem_limit,
        ),
        cost_estimate=cost,
    )(x, weight, bias2d)

    return out[:, :d_out] if pad_out else out


if __name__ == "__main__":
    key = jax.random.PRNGKey(0)
    k_x, k_w, k_b, k_x2, k_w2, k_b2 = jax.random.split(key, 6)

    BATCH_SIZE = 8  # MinibatchWrapper batch size (identity for a row-wise Linear)

    # ---- Case 1: resident-K path; d_out=160 (pad fraction too large -> no lane
    # padding, no trailing slice pass), megacore row split, Buffered(1) weight.
    N, D_IN, D_OUT = 300, 96, 160
    x = jax.random.normal(k_x, (N, D_IN), dtype=jnp.float32)
    bound = 1.0 / math.sqrt(D_IN)
    w = jax.random.uniform(k_w, (D_IN, D_OUT), jnp.float32, -bound, bound)
    b = jax.random.uniform(k_b, (D_OUT,), jnp.float32, -bound, bound)

    y = jax.block_until_ready(minibatch_linear(x, w, b, BATCH_SIZE))
    y_ref = x @ w + b
    assert y.shape == (N, D_OUT)
    assert jnp.allclose(y, y_ref, atol=1e-4, rtol=1e-4), float(
        jnp.max(jnp.abs(y - y_ref)))

    # ---- Case 2: K-split accumulator path (3-axis grid, f32 VMEM scratch,
    # ragged last row tile). ---------------------------------------------------
    N2, D_IN2, D_OUT2 = 260, 384, 256
    x2 = jax.random.normal(k_x2, (N2, D_IN2), dtype=jnp.float32)
    bound2 = 1.0 / math.sqrt(D_IN2)
    w2 = jax.random.uniform(k_w2, (D_IN2, D_OUT2), jnp.float32, -bound2, bound2)
    b2 = jax.random.uniform(k_b2, (D_OUT2,), jnp.float32, -bound2, bound2)

    y2 = jax.block_until_ready(
        minibatch_linear(x2, w2, b2, BATCH_SIZE, tile_m=128, tile_k=128))
    y2_ref = x2 @ w2 + b2
    assert y2.shape == (N2, D_OUT2)
    assert jnp.allclose(y2, y2_ref, atol=1e-4, rtol=1e-4), float(
        jnp.max(jnp.abs(y2 - y2_ref)))

    # ---- Case 3: bf16 MXU path (f32 accumulation, f32 output). ---------------
    y3 = jax.block_until_ready(
        minibatch_linear(x, w, b, BATCH_SIZE, compute_dtype=jnp.bfloat16))
    assert y3.shape == (N, D_OUT)
    assert jnp.allclose(y3, y_ref, atol=6e-2, rtol=6e-2), float(
        jnp.max(jnp.abs(y3 - y_ref)))

    print("KERNEL_OK")
</pallas_src>

<mosaic_0001>
module attributes {stable_mosaic.version = 11 : i64} {
  func.func @_linear_kernel(%arg0: i32, %arg1: i32, %arg2: memref<152x96xf32, #tpu.memory_space<vmem>>, %arg3: memref<96x160xf32, #tpu.memory_space<vmem>>, %arg4: memref<1x160xf32, #tpu.memory_space<vmem>>, %arg5: memref<152x160xf32, #tpu.memory_space<vmem>>) attributes {dimension_semantics = [#tpu.dimension_semantics<parallel>, #tpu.dimension_semantics<parallel>], iteration_bounds = array<i64: 1, 2>, scalar_prefetch = 0 : i64, scratch_operands = 0 : i64, tpu.core_type = #tpu.core_type<tc>, window_params = [{transform_indices = @transform_0, window_bounds = array<i64: 152, 96>}, {pipeline_mode = #tpu.pipeline_mode<synchronous>, transform_indices = @transform_1, window_bounds = array<i64: 96, 160>}, {pipeline_mode = #tpu.pipeline_mode<synchronous>, transform_indices = @transform_2, window_bounds = array<i64: 1, 160>}, {transform_indices = @transform_3, window_bounds = array<i64: 152, 160>}]} {
    %c0 = arith.constant 0 : index
    %c0_0 = arith.constant 0 : index
    %0 = vector.load %arg2[%c0, %c0_0] : memref<152x96xf32, #tpu.memory_space<vmem>>, vector<152x96xf32>
    %c0_1 = arith.constant 0 : index
    %c0_2 = arith.constant 0 : index
    %1 = vector.load %arg3[%c0_1, %c0_2] : memref<96x160xf32, #tpu.memory_space<vmem>>, vector<96x160xf32>
    %cst = arith.constant dense<0.000000e+00> : vector<152x160xf32>
    %2 = tpu.matmul %0, %1, %cst {dimension_numbers = #tpu.dot_dimension_numbers<[1], [0], [0], [1], [0, 0, 1, 1], [], []>} : vector<152x96xf32>, vector<96x160xf32>, vector<152x160xf32> -> vector<152x160xf32>
    %c0_3 = arith.constant 0 : index
    %c0_4 = arith.constant 0 : index
    %3 = vector.load %arg4[%c0_3, %c0_4] : memref<1x160xf32, #tpu.memory_space<vmem>>, vector<1x160xf32>
    %4 = vector.broadcast %3 : vector<1x160xf32> to vector<152x160xf32>
    %5 = arith.addf %2, %4 : vector<152x160xf32>
    %c0_5 = arith.constant 0 : index
    %c0_6 = arith.constant 0 : index
    %6 = vector.load %arg5[%c0_5, %c0_6] : memref<152x160xf32, #tpu.memory_space<vmem>>, vector<152x160xf32>
    tpu.vector_store %arg5[%c0_5, %c0_6], %5 {strides = array<i32>} : memref<152x160xf32, #tpu.memory_space<vmem>>, vector<152x160xf32>,
    return
  }
  func.func @transform_0(%arg0: i32, %arg1: i32) -> (i32, i32) {
    %c0_i32 = arith.constant 0 : i32
    %c0_i32_0 = arith.constant 0 : i32
    return %arg1, %c0_i32 : i32, i32
  }
  func.func @transform_1(%arg0: i32, %arg1: i32) -> (i32, i32) {
    %c0_i32 = arith.constant 0 : i32
    %c0_i32_0 = arith.constant 0 : i32
    return %c0_i32, %arg0 : i32, i32
  }
  func.func @transform_2(%arg0: i32, %arg1: i32) -> (i32, i32) {
    %c0_i32 = arith.constant 0 : i32
    %c0_i32_0 = arith.constant 0 : i32
    return %c0_i32, %arg0 : i32, i32
  }
  func.func @transform_3(%arg0: i32, %arg1: i32) -> (i32, i32) {
    %c0_i32 = arith.constant 0 : i32
    return %arg1, %arg0 : i32, i32
  }
}

</mosaic_0001>

<llo_original>
// kernel: tpu_custom_call.1
$region0: #{tpu_custom_call.1}
  #allocation0 [shape = 'u32[]', space=smem, size = 0x4, offset = 0x4, fixed_abs, tag = 'smem constant byte address 0x4 - core index']
  #allocation1 [shape = 'u32[144,128]{1,0:T(1,128)}', space=vmem, size = 0x12000, scoped, tag = 'internal scratch']
  %s0 = inlined_call_operand.vmem [shape: f32[300,96], index: 0, kind: input, shape index: {}]
  %s1 = inlined_call_operand.vmem [shape: f32[96,160], index: 1, kind: input, shape index: {}]
  %s2 = inlined_call_operand.vmem [shape: f32[1,160], index: 2, kind: input, shape index: {}]
  %s3 = inlined_call_operand.vmem [shape: f32[300,160], index: 3, kind: output, shape index: {}]
  %s4 = sld [smem:[#allocation0]]
  $region45: #{tpu_custom_call.1} parent=0
    _
  %s6 = ssub.s32 1, %s4
  %s7 = scalar_select 0, %s6, %s4
  loop: start=0, step=1, limit=4
  $region2: #{tpu_custom_call.1} parent=0 // loop_pre_header
    _
  $region3: #{tpu_custom_call.1} parent=0 // loop_header
    %s9 = sphi 0, %s13
    %p10 = scmp.ge.s32.totalorder %s9, 4
    %s16 = sphi 0, %s28
    %s17 = sphi 0, %s24
    %s18 = sphi 0, %s16
    %s19 = sphi 0, %s17
    %s20 = sphi 0, %s18
    %s21 = sphi 0, %s19
    %s31 = sphi 0, %s33
    %s34 = sphi 0, %s31
    %s35 = sphi 0, %s34
    %s51 = sphi 0, %s35
    %s57 = sphi 0, %s59
    %s60 = sphi 0, %s57
    %s61 = sphi 0, %s60
    %s77 = sphi 0, %s61
    %s83 = sphi 0, %s85
    %s86 = sphi 0, %s83
    %s87 = sphi 0, %s86
    %s103 = sphi 0, %s87
    %s111 = sphi 0, %s113
    %s114 = sphi 0, %s111
    %s115 = sphi 0, %s114
    %s131 = sphi 0, %s115
  $region4: #{tpu_custom_call.1} parent=0 // loop_header_branch
    %12 = sbr.rel (%p10) target = $region8
  $region5: #{tpu_custom_call.1} parent=0 // loop_body
    %s14 = ssub.s32 %s9, 1
    %s15 = ssub.s32 %s9, 2
    %s22 = sadd.s32 1, %s17
    %p23 = scmp.ge.s32.totalorder %s22, 2
    %s24 = scalar_select %p23, 0, %s22
    %s25 = sadd.s32 1, %s16
    %s26 = scalar_select %p23, %s25, %s16
    %p27 = scmp.ge.s32.totalorder %s26, 1
    %s28 = scalar_select %p27, 0, %s26
    %s29 = ssub.s32 %s17, %s24
    %p30 = scmp.eq.s32.totalorder %s29, 0
    %s32 = sadd.s32 %s31, 1
    %s33 = scalar_select %p30, %s31, %s32
    %p36 = pneg %p30
    %p37 = scmp.eq.s32.totalorder %s9, 1
    %p38 = por %p36, %p37
    %p39 = scmp.ne.s32.totalorder %s31, %s34
    %p40 = scmp.eq.s32.totalorder %s9, 0
    %p41 = por %p39, %p40
    %p42 = scmp.ne.s32.totalorder %s31, %s34
    %p43 = scmp.eq.s32.totalorder %s14, 1
    %p44 = por %p42, %p43
    %p45 = scmp.ne.s32.totalorder %s34, %s35
    %p46 = scmp.eq.s32.totalorder %s14, 0
    %p47 = por %p45, %p46
    %p48 = scmp.ne.s32.totalorder %s34, %s35
    %p49 = scmp.eq.s32.totalorder %s15, 1
    %p50 = por %p48, %p49
    %p52 = scmp.ne.s32.totalorder %s35, %s51
    %p53 = scmp.eq.s32.totalorder %s15, 0
    %p54 = por %p52, %p53
    %s55 = ssub.s32 %s16, %s28
    %p56 = scmp.eq.s32.totalorder %s55, 0
    %s58 = sadd.s32 %s57, 1
    %s59 = scalar_select %p56, %s57, %s58
    %p62 = pneg %p56
    %p63 = scmp.eq.s32.totalorder %s9, 1
    %p64 = por %p62, %p63
    %p65 = scmp.ne.s32.totalorder %s57, %s60
    %p66 = scmp.eq.s32.totalorder %s9, 0
    %p67 = por %p65, %p66
    %p68 = scmp.ne.s32.totalorder %s57, %s60
    %p69 = scmp.eq.s32.totalorder %s14, 1
    %p70 = por %p68, %p69
    %p71 = scmp.ne.s32.totalorder %s60, %s61
    %p72 = scmp.eq.s32.totalorder %s14, 0
    %p73 = por %p71, %p72
    %p74 = scmp.ne.s32.totalorder %s60, %s61
    %p75 = scmp.eq.s32.totalorder %s15, 1
    %p76 = por %p74, %p75
    %p78 = scmp.ne.s32.totalorder %s61, %s77
    %p79 = scmp.eq.s32.totalorder %s15, 0
    %p80 = por %p78, %p79
    %s81 = ssub.s32 %s16, %s28
    %p82 = scmp.eq.s32.totalorder %s81, 0
    %s84 = sadd.s32 %s83, 1
    %s85 = scalar_select %p82, %s83, %s84
    %p88 = pneg %p82
    %p89 = scmp.eq.s32.totalorder %s9, 1
    %p90 = por %p88, %p89
    %p91 = scmp.ne.s32.totalorder %s83, %s86
    %p92 = scmp.eq.s32.totalorder %s9, 0
    %p93 = por %p91, %p92
    %p94 = scmp.ne.s32.totalorder %s83, %s86
    %p95 = scmp.eq.s32.totalorder %s14, 1
    %p96 = por %p94, %p95
    %p97 = scmp.ne.s32.totalorder %s86, %s87
    %p98 = scmp.eq.s32.totalorder %s14, 0
    %p99 = por %p97, %p98
    %p100 = scmp.ne.s32.totalorder %s86, %s87
    %p101 = scmp.eq.s32.totalorder %s15, 1
    %p102 = por %p100, %p101
    %p104 = scmp.ne.s32.totalorder %s87, %s103
    %p105 = scmp.eq.s32.totalorder %s15, 0
    %p106 = por %p104, %p105
    %s107 = ssub.s32 %s17, %s24
    %s108 = ssub.s32 %s16, %s28
    %s109 = sor.u32 %s107, %s108
    %p110 = scmp.eq.s32.totalorder %s109, 0
    %s112 = sadd.s32 %s111, 1
    %s113 = scalar_select %p110, %s111, %s112
    %p116 = pneg %p110
    %p117 = scmp.eq.s32.totalorder %s9, 1
    %p118 = por %p116, %p117
    %p119 = scmp.ne.s32.totalorder %s111, %s114
    %p120 = scmp.eq.s32.totalorder %s9, 0
    %p121 = por %p119, %p120
    %p122 = scmp.ne.s32.totalorder %s111, %s114
    %p123 = scmp.eq.s32.totalorder %s14, 1
    %p124 = por %p122, %p123
    %p125 = scmp.ne.s32.totalorder %s114, %s115
    %p126 = scmp.eq.s32.totalorder %s14, 0
    %p127 = por %p125, %p126
    %p128 = scmp.ne.s32.totalorder %s114, %s115
    %p129 = scmp.eq.s32.totalorder %s15, 1
    %p130 = por %p128, %p129
    %p132 = scmp.ne.s32.totalorder %s115, %s131
    %p133 = scmp.eq.s32.totalorder %s15, 0
    %p134 = por %p132, %p133
    %p135 = scmp.le.s32.totalorder 1, %s9
    %p136 = scmp.lt.s32.totalorder %s9, 3
    %p137 = pnand %p135, %p136
    %p138 = pneg %p137
    // Predicated region
    $region9: #{tpu_custom_call.1} parent=5 // pred_check
      _
    $region10: #{tpu_custom_call.1} parent=5 // pred_check_branch
      %140 = sbr.rel (%p137) target = $region12
    $region11: #{tpu_custom_call.1} parent=5 // pred_region
      %s141 = ssub.s32 %s9, 1
      // Predicated region
      $region13: #{tpu_custom_call.1} parent=11 // pred_check
        %p142 = pneg %p73
      $region14: #{tpu_custom_call.1} parent=11 // pred_check_branch
        %144 = sbr.rel (%p142) target = $region16
      $region15: #{tpu_custom_call.1} parent=11 // pred_region
        %s145 = smul.u32 2, %s18
        %p146 = scmp.lt.s32.totalorder %s145, 1
        %s147 = scalar_select %p146, %s145, 1
        %s148 = smul.addr %s147, 8
        %s149 = scalar_lea.vmem %s1, %s148
        %s150 = smul.u32 2, %s18
      $region16: #{tpu_custom_call.1} parent=11 // pred_fallthru
        _
      // Predicated region
      $region17: #{tpu_custom_call.1} parent=11 // pred_check
        %p151 = pneg %p99
      $region18: #{tpu_custom_call.1} parent=11 // pred_check_branch
        %153 = sbr.rel (%p151) target = $region20
      $region19: #{tpu_custom_call.1} parent=11 // pred_region
        %s154 = smul.u32 2, %s18
        %p155 = scmp.lt.s32.totalorder %s154, 1
        %s156 = scalar_select %p155, %s154, 1
        %s157 = scalar_lea.vmem %s2, %s156
        %s158 = smul.u32 2, %s18
      $region20: #{tpu_custom_call.1} parent=11 // pred_fallthru
        _
    $region12: #{tpu_custom_call.1} parent=5 // pred_fallthru
      _
    %p159 = scmp.lt.s32.totalorder %s9, 2
    // Predicated region
    $region21: #{tpu_custom_call.1} parent=5 // pred_check
      %p160 = pneg %p159
    $region22: #{tpu_custom_call.1} parent=5 // pred_check_branch
      %162 = sbr.rel (%p160) target = $region24
    $region23: #{tpu_custom_call.1} parent=5 // pred_region
      // Predicated region
      $region25: #{tpu_custom_call.1} parent=23 // pred_check
        %p163 = pneg %p41
      $region26: #{tpu_custom_call.1} parent=23 // pred_check_branch
        %165 = sbr.rel (%p163) target = $region28
      $region27: #{tpu_custom_call.1} parent=23 // pred_region
        %s166 = smul.u32 19, %s17
        %p167 = scmp.lt.s32.totalorder %s166, 37
        %s168 = scalar_select %p167, %s166, 37
        %s169 = smul.addr %s168, 8
        %s170 = scalar_lea.vmem %s0, %s169
        %s171 = smul.u32 19, %s17
      $region28: #{tpu_custom_call.1} parent=23 // pred_fallthru
        _
    $region24: #{tpu_custom_call.1} parent=5 // pred_fallthru
      _
    %p172 = scmp.le.s32.totalorder 1, %s9
    %p173 = scmp.lt.s32.totalorder %s9, 3
    %p174 = pnand %p172, %p173
    %p175 = pneg %p174
    // Predicated region
    $region29: #{tpu_custom_call.1} parent=5 // pred_check
      _
    $region30: #{tpu_custom_call.1} parent=5 // pred_check_branch
      %177 = sbr.rel (%p174) target = $region32
    $region31: #{tpu_custom_call.1} parent=5 // pred_region
      %s178 = ssub.s32 %s9, 1
      %s179 = smul.u32 19, %s19
      %p180 = scmp.lt.s32.totalorder %s179, 37
      %s181 = scalar_select %p180, %s179, 37
      %s182 = smul.addr %s181, 8
      %s183 = scalar_lea.vmem %s0, %s182
      %p184 = pneg %p47
      %p185 = pneg %p44
      %s186 = smul.u32 2, %s18
      %p187 = scmp.lt.s32.totalorder %s186, 1
      %s188 = scalar_select %p187, %s186, 1
      %s189 = smul.addr %s188, 8
      %s190 = scalar_lea.vmem %s1, %s189
      %p191 = pneg %p73
      %p192 = pneg %p70
      %s193 = smul.u32 2, %s18
      %p194 = scmp.lt.s32.totalorder %s193, 1
      %s195 = scalar_select %p194, %s193, 1
      %s196 = scalar_lea.vmem %s2, %s195
      %p197 = pneg %p99
      %p198 = pneg %p96
      %p199 = pneg %p127
      %p200 = pneg %p124
      %s201 = smul.u32 19, %s19
      %s202 = smul.u32 2, %s18
      %p203 = scmp.lt.s32.totalorder %s201, 37
      %s204 = scalar_select %p203, %s201, 37
      %p205 = scmp.lt.s32.totalorder %s202, 1
      %s206 = scalar_select %p205, %s202, 1
      %s207 = smul.addr %s204, 2
      %s208 = sadd.s32 %s206, %s207
      %s209 = smul.addr %s208, 8
      %s210 = scalar_lea.vmem %s3, %s209
      %s211 = smul.u32 19, %s19
      %p212 = scmp.lt.s32.totalorder %s211, 37
      %s213 = scalar_select %p212, %s211, 37
      %s214 = smul.addr %s213, 8
      %s215 = scalar_lea.vmem %s0, %s214
      %s216 = smul.u32 19, %s19
      %s217 = smul.u32 2, %s18
      %p218 = scmp.lt.s32.totalorder %s217, 1
      %s219 = scalar_select %p218, %s217, 1
      %s220 = smul.addr %s219, 8
      %s221 = scalar_lea.vmem %s1, %s220
      %s222 = smul.u32 2, %s18
      %s223 = smul.u32 2, %s18
      %p224 = scmp.lt.s32.totalorder %s223, 1
      %s225 = scalar_select %p224, %s223, 1
      %s226 = scalar_lea.vmem %s2, %s225
      %s227 = smul.u32 2, %s18
      %s228 = smul.u32 19, %s19
      %s229 = smul.u32 2, %s18
      %p230 = scmp.lt.s32.totalorder %s228, 37
      %s231 = scalar_select %p230, %s228, 37
      %p232 = scmp.lt.s32.totalorder %s229, 1
      %s233 = scalar_select %p232, %s229, 1
      %s234 = smul.addr %s231, 2
      %s235 = sadd.s32 %s233, %s234
      %s236 = smul.addr %s235, 8
      %s237 = scalar_lea.vmem %s3, %s236
      %s238 = smul.u32 19, %s19
      %s239 = smul.u32 2, %s18
      %v240 = vld [vmem:[%s215] sm:$0xff]
      %v241 = vld [vmem:[%s215 + $0x8] sm:$0xff]
      %v242 = vld [vmem:[%s215 + $0x10] sm:$0xff]
      %v243 = vld [vmem:[%s215 + $0x18] sm:$0xff]
      %v244 = vld [vmem:[%s215 + $0x20] sm:$0xff]
      %v245 = vld [vmem:[%s215 + $0x28] sm:$0xff]
      %v246 = vld [vmem:[%s215 + $0x30] sm:$0xff]
      %v247 = vld [vmem:[%s215 + $0x38] sm:$0xff]
      %v248 = vld [vmem:[%s215 + $0x40] sm:$0xff]
      %v249 = vld [vmem:[%s215 + $0x48] sm:$0xff]
      %v250 = vld [vmem:[%s215 + $0x50] sm:$0xff]
      %v251 = vld [vmem:[%s215 + $0x58] sm:$0xff]
      %v252 = vld [vmem:[%s215 + $0x60] sm:$0xff]
      %v253 = vld [vmem:[%s215 + $0x68] sm:$0xff]
      %v254 = vld [vmem:[%s215 + $0x70] sm:$0xff]
      %v255 = vld [vmem:[%s215 + $0x78] sm:$0xff]
      %v256 = vld [vmem:[%s215 + $0x80] sm:$0xff]
      %v257 = vld [vmem:[%s215 + $0x88] sm:$0xff]
      %v258 = vld [vmem:[%s215 + $0x90] sm:$0xff]
      %v259 = vld [vmem:[%s221] sm:$0xff]
      %v260 = vld [vmem:[%s221 + $0x8] sm:$0xff]
      %v261 = vld [vmem:[%s221 + $0x10] sm:$0xff]
      %v262 = vld [vmem:[%s221 + $0x18] sm:$0xff]
      %v263 = vld [vmem:[%s221 + $0x20] sm:$0xff]
      %v264 = vld [vmem:[%s221 + $0x28] sm:$0xff]
      %v265 = vld [vmem:[%s221 + $0x30] sm:$0xff]
      %v266 = vld [vmem:[%s221 + $0x38] sm:$0xff]
      %v267 = vld [vmem:[%s221 + $0x40] sm:$0xff]
      %v268 = vld [vmem:[%s221 + $0x48] sm:$0xff]
      %v269 = vld [vmem:[%s221 + $0x50] sm:$0xff]
      %v270 = vld [vmem:[%s221 + $0x58] sm:$0xff]
      %v271 = vld [vmem:[%s221 + $0x60] sm:$0xff]
      %v272 = vld [vmem:[%s221 + $0x68] sm:$0xff]
      %v273 = vld [vmem:[%s221 + $0x70] sm:$0xff]
      %v274 = vld [vmem:[%s221 + $0x78] sm:$0xff]
      %v275 = vld [vmem:[%s221 + $0x80] sm:$0xff]
      %v276 = vld [vmem:[%s221 + $0x88] sm:$0xff]
      %v277 = vld [vmem:[%s221 + $0x90] sm:$0xff]
      %v278 = vld [vmem:[%s221 + $0x98] sm:$0xff]
      %v279 = vld [vmem:[%s221 + $0xa0] sm:$0xff]
      %v280 = vld [vmem:[%s221 + $0xa8] sm:$0xff]
      %v281 = vld [vmem:[%s221 + $0xb0] sm:$0xff]
      %v282 = vld [vmem:[%s221 + $0xb8] sm:$0xff]
      %v283 = vld [vmem:[%s226] sm:$0x3]
      %v285 = vlaneseq
      %v286 = vshrl.u32 %v285, 7
      %v287 = vsub.s32 0, %v286
      %v288 = vrot.slane %v283, %v287
      %v289 = vlaneseq
      %v290 = vshrl.u32 %v289, 7
      %v291 = vsub.s32 1, %v290
      %v292 = vrot.slane %v283, %v291
      %vm295 = vcmask 785408
      %v297 = vsel %vm295, %v240, 0
      %v300 = vsel %vm295, %v241, 0
      %v303 = vsel %vm295, %v242, 0
      %v306 = vsel %vm295, %v243, 0
      %v309 = vsel %vm295, %v244, 0
      %v312 = vsel %vm295, %v245, 0
      %v315 = vsel %vm295, %v246, 0
      %v318 = vsel %vm295, %v247, 0
      %v321 = vsel %vm295, %v248, 0
      %v324 = vsel %vm295, %v249, 0
      %v327 = vsel %vm295, %v250, 0
      %v330 = vsel %vm295, %v251, 0
      %v333 = vsel %vm295, %v252, 0
      %v336 = vsel %vm295, %v253, 0
      %v339 = vsel %vm295, %v254, 0
      %v342 = vsel %vm295, %v255, 0
      %v345 = vsel %vm295, %v256, 0
      %v348 = vsel %vm295, %v257, 0
      %v351 = vsel %vm295, %v258, 0
      %353 = vmatprep.subr.mxu0 %v260
      %354 = vmatpush1.msra.mxu0 %v259
      %355 = vmatprep.subr.mxu0 %v262
      %356 = vmatpush1.msra.mxu0 %v261
      %357 = vmatprep.subr.mxu0 %v264
      %358 = vmatpush1.msra.mxu0 %v263
      %359 = vmatprep.subr.mxu0 %v266
      %360 = vmatpush1.msra.mxu0 %v265
      %361 = vmatprep.subr.mxu0 %v268
      %362 = vmatpush1.msra.mxu0 %v267
      %363 = vmatprep.subr.mxu0 %v270
      %364 = vmatpush1.msra.mxu0 %v269
      %365 = vmatprep.subr.mxu0 %v272
      %366 = vmatpush1.msra.mxu0 %v271
      %367 = vmatprep.subr.mxu0 %v274
      %368 = vmatpush1.msra.mxu0 %v273
      %369 = vmatprep.subr.mxu0 %v276
      %370 = vmatpush1.msra.mxu0 %v275
      %371 = vmatprep.subr.mxu0 %v278
      %372 = vmatpush1.msra.mxu0 %v277
      %373 = vmatprep.subr.mxu0 %v280
      %374 = vmatpush1.msra.mxu0 %v279
      %375 = vmatprep.subr.mxu0 %v282
      %376 = vmatpush1.msra.mxu0 %v281
      %377 = vmatprep.subr.mxu0 0.0
      %378 = vmatpush1.msra.mxu0 0.0
      %379 = vmatprep.subr.mxu0 0.0
      %380 = vmatpush1.msra.mxu0 0.0
      %381 = vmatprep.subr.mxu0 0.0
      %382 = vmatpush1.msra.mxu0 0.0
      %383 = vmatprep.subr.mxu0 0.0
      %384 = vmatpush1.msra.mxu0 0.0
      %385 = vmatprep.subr.mxu0 0.0
      %386 = vmatpush1.msra.mxu0 0.0
      %387 = vmatprep.subr.mxu0 0.0
      %388 = vmatpush1.msra.mxu0 0.0
      %389 = vmatprep.subr.mxu0 0.0
      %390 = vmatpush1.msra.mxu0 0.0
      %391 = vmatprep.subr.mxu0 0.0
      %392 = vmatpush1.msra.mxu0 0.0
      %393 = vmatprep.subr.mxu0 0.0
      %394 = vmatpush1.msra.mxu0 0.0
      %395 = vmatprep.subr.mxu0 0.0
      %396 = vmatpush1.msra.mxu0 0.0
      %397 = vmatprep.subr.mxu0 0.0
      %398 = vmatpush1.msra.mxu0 0.0
      %399 = vmatprep.subr.mxu0 0.0
      %400 = vmatpush1.msra.mxu0 0.0
      %401 = vmatprep.subr.mxu0 0.0
      %402 = vmatpush1.msra.mxu0 0.0
      %403 = vmatprep.subr.mxu0 0.0
      %404 = vmatpush1.msra.mxu0 0.0
      %405 = vmatprep.subr.mxu0 0.0
      %406 = vmatpush1.msra.mxu0 0.0
      %407 = vmatprep.subr.mxu0 0.0
      %408 = vmatpush1.msra.mxu0 0.0
      %409 = vmatprep.subr.mxu0 0.0
      %410 = vmatpush1.msra.mxu0 0.0
      %411 = vmatprep.subr.mxu0 0.0
      %412 = vmatpush1.msra.mxu0 0.0
      %413 = vmatprep.subr.mxu0 0.0
      %414 = vmatpush1.msra.mxu0 0.0
      %415 = vmatprep.subr.mxu0 0.0
      %416 = vmatpush1.msra.mxu0 0.0
      %417 = vmatprep.mubr.f32.mxu0 0.0
      %418 = vmatmul.mubr.f32.gmra.mrb[0].mxu0 %v297
      %v419 = vpop.f32.mrb[0].mxu0
      %v420 = vadd.f32 %v288, %v419
      %v421 = vpop.f32.mrb[0].mxu0
      %v422 = vadd.f32 %v292, %v421
      %423 = vmatprep.mubr.f32.mxu0 0.0
      %424 = vmatmul.mubr.f32.gmra.mrb[0].mxu0 %v300
      %v425 = vpop.f32.mrb[0].mxu0
      %v426 = vadd.f32 %v288, %v425
      %v427 = vpop.f32.mrb[0].mxu0
      %v428 = vadd.f32 %v292, %v427
      %429 = vmatprep.mubr.f32.mxu0 0.0
      %430 = vmatmul.mubr.f32.gmra.mrb[0].mxu0 %v303
      %v431 = vpop.f32.mrb[0].mxu0
      %v432 = vadd.f32 %v288, %v431
      %v433 = vpop.f32.mrb[0].mxu0
      %v434 = vadd.f32 %v292, %v433
      %435 = vmatprep.mubr.f32.mxu0 0.0
      %436 = vmatmul.mubr.f32.gmra.mrb[0].mxu0 %v306
      %v437 = vpop.f32.mrb[0].mxu0
      %v438 = vadd.f32 %v288, %v437
      %v439 = vpop.f32.mrb[0].mxu0
      %v440 = vadd.f32 %v292, %v439
      %441 = vmatprep.mubr.f32.mxu0 0.0
      %442 = vmatmul.mubr.f32.gmra.mrb[0].mxu0 %v309
      %v443 = vpop.f32.mrb[0].mxu0
      %v444 = vadd.f32 %v288, %v443
      %v445 = vpop.f32.mrb[0].mxu0
      %v446 = vadd.f32 %v292, %v445
      %447 = vmatprep.mubr.f32.mxu0 0.0
      %448 = vmatmul.mubr.f32.gmra.mrb[0].mxu0 %v312
      %v449 = vpop.f32.mrb[0].mxu0
      %v450 = vadd.f32 %v288, %v449
      %v451 = vpop.f32.mrb[0].mxu0
      %v452 = vadd.f32 %v292, %v451
      %453 = vmatprep.mubr.f32.mxu0 0.0
      %454 = vmatmul.mubr.f32.gmra.mrb[0].mxu0 %v315
      %v455 = vpop.f32.mrb[0].mxu0
      %v456 = vadd.f32 %v288, %v455
      %v457 = vpop.f32.mrb[0].mxu0
      %v458 = vadd.f32 %v292, %v457
      %459 = vmatprep.mubr.f32.mxu0 0.0
      %460 = vmatmul.mubr.f32.gmra.mrb[0].mxu0 %v318
      %v461 = vpop.f32.mrb[0].mxu0
      %v462 = vadd.f32 %v288, %v461
      %v463 = vpop.f32.mrb[0].mxu0
      %v464 = vadd.f32 %v292, %v463
      %465 = vmatprep.mubr.f32.mxu0 0.0
      %466 = vmatmul.mubr.f32.gmra.mrb[0].mxu0 %v321
      %v467 = vpop.f32.mrb[0].mxu0
      %v468 = vadd.f32 %v288, %v467
      %v469 = vpop.f32.mrb[0].mxu0
      %v470 = vadd.f32 %v292, %v469
      %471 = vmatprep.mubr.f32.mxu0 0.0
      %472 = vmatmul.mubr.f32.gmra.mrb[0].mxu0 %v324
      %v473 = vpop.f32.mrb[0].mxu0
      %v474 = vadd.f32 %v288, %v473
      %v475 = vpop.f32.mrb[0].mxu0
      %v476 = vadd.f32 %v292, %v475
      %477 = vmatprep.mubr.f32.mxu0 0.0
      %478 = vmatmul.mubr.f32.gmra.mrb[0].mxu0 %v327
      %v479 = vpop.f32.mrb[0].mxu0
      %v480 = vadd.f32 %v288, %v479
      %v481 = vpop.f32.mrb[0].mxu0
      %v482 = vadd.f32 %v292, %v481
      %483 = vmatprep.mubr.f32.mxu0 0.0
      %484 = vmatmul.mubr.f32.gmra.mrb[0].mxu0 %v330
      %v485 = vpop.f32.mrb[0].mxu0
      %v486 = vadd.f32 %v288, %v485
      %v487 = vpop.f32.mrb[0].mxu0
      %v488 = vadd.f32 %v292, %v487
      %489 = vmatprep.mubr.f32.mxu0 0.0
      %490 = vmatmul.mubr.f32.gmra.mrb[0].mxu0 %v333
      %v491 = vpop.f32.mrb[0].mxu0
      %v492 = vadd.f32 %v288, %v491
      %v493 = vpop.f32.mrb[0].mxu0
      %v494 = vadd.f32 %v292, %v493
      %495 = vmatprep.mubr.f32.mxu0 0.0
      %496 = vmatmul.mubr.f32.gmra.mrb[0].mxu0 %v336
      %v497 = vpop.f32.mrb[0].mxu0
      %v498 = vadd.f32 %v288, %v497
      %v499 = vpop.f32.mrb[0].mxu0
      %v500 = vadd.f32 %v292, %v499
      %501 = vmatprep.mubr.f32.mxu0 0.0
      %502 = vmatmul.mubr.f32.gmra.mrb[0].mxu0 %v339
      %v503 = vpop.f32.mrb[0].mxu0
      %v504 = vadd.f32 %v288, %v503
      %v505 = vpop.f32.mrb[0].mxu0
      %v506 = vadd.f32 %v292, %v505
      %507 = vmatprep.mubr.f32.mxu0 0.0
      %508 = vmatmul.mubr.f32.gmra.mrb[0].mxu0 %v342
      %v509 = vpop.f32.mrb[0].mxu0
      %v510 = vadd.f32 %v288, %v509
      %v511 = vpop.f32.mrb[0].mxu0
      %v512 = vadd.f32 %v292, %v511
      %513 = vmatprep.mubr.f32.mxu0 0.0
      %514 = vmatmul.mubr.f32.gmra.mrb[0].mxu0 %v345
      %v515 = vpop.f32.mrb[0].mxu0
      %v516 = vadd.f32 %v288, %v515
      %v517 = vpop.f32.mrb[0].mxu0
      %v518 = vadd.f32 %v292, %v517
      %519 = vmatprep.mubr.f32.mxu0 0.0
      %520 = vmatmul.mubr.f32.gmra.mrb[0].mxu0 %v348
      %v521 = vpop.f32.mrb[0].mxu0
      %v522 = vadd.f32 %v288, %v521
      %v523 = vpop.f32.mrb[0].mxu0
      %v524 = vadd.f32 %v292, %v523
      %525 = vmatprep.mubr.f32.mxu0 0.0
      %526 = vmatmul.mubr.f32.gmra.mrb[0].mxu0 %v351
      %v527 = vpop.f32.mrb[0].mxu0
      %v528 = vadd.f32 %v288, %v527
      %v529 = vpop.f32.mrb[0].mxu0
      %v530 = vadd.f32 %v292, %v529
      %531 = vdwg.mxu0
      %532 = vst [vmem:[%s237] sm:$0xff] %v420
      %vm533 = vcmask 261120
      %534 = vst.msk [vmem:[%s237 + $0x8] sm:$0xff] %vm533, %v422
      %535 = vst [vmem:[%s237 + $0x10] sm:$0xff] %v426
      %536 = vst.msk [vmem:[%s237 + $0x18] sm:$0xff] %vm533, %v428
      %537 = vst [vmem:[%s237 + $0x20] sm:$0xff] %v432
      %538 = vst.msk [vmem:[%s237 + $0x28] sm:$0xff] %vm533, %v434
      %539 = vst [vmem:[%s237 + $0x30] sm:$0xff] %v438
      %540 = vst.msk [vmem:[%s237 + $0x38] sm:$0xff] %vm533, %v440
      %541 = vst [vmem:[%s237 + $0x40] sm:$0xff] %v444
      %542 = vst.msk [vmem:[%s237 + $0x48] sm:$0xff] %vm533, %v446
      %543 = vst [vmem:[%s237 + $0x50] sm:$0xff] %v450
      %544 = vst.msk [vmem:[%s237 + $0x58] sm:$0xff] %vm533, %v452
      %545 = vst [vmem:[%s237 + $0x60] sm:$0xff] %v456
      %546 = vst.msk [vmem:[%s237 + $0x68] sm:$0xff] %vm533, %v458
      %547 = vst [vmem:[%s237 + $0x70] sm:$0xff] %v462
      %548 = vst.msk [vmem:[%s237 + $0x78] sm:$0xff] %vm533, %v464
      %549 = vst [vmem:[%s237 + $0x80] sm:$0xff] %v468
      %550 = vst.msk [vmem:[%s237 + $0x88] sm:$0xff] %vm533, %v470
      %551 = vst [vmem:[%s237 + $0x90] sm:$0xff] %v474
      %552 = vst.msk [vmem:[%s237 + $0x98] sm:$0xff] %vm533, %v476
      %553 = vst [vmem:[%s237 + $0xa0] sm:$0xff] %v480
      %554 = vst.msk [vmem:[%s237 + $0xa8] sm:$0xff] %vm533, %v482
      %555 = vst [vmem:[%s237 + $0xb0] sm:$0xff] %v486
      %556 = vst.msk [vmem:[%s237 + $0xb8] sm:$0xff] %vm533, %v488
      %557 = vst [vmem:[%s237 + $0xc0] sm:$0xff] %v492
      %558 = vst.msk [vmem:[%s237 + $0xc8] sm:$0xff] %vm533, %v494
      %559 = vst [vmem:[%s237 + $0xd0] sm:$0xff] %v498
      %560 = vst.msk [vmem:[%s237 + $0xd8] sm:$0xff] %vm533, %v500
      %561 = vst [vmem:[%s237 + $0xe0] sm:$0xff] %v504
      %562 = vst.msk [vmem:[%s237 + $0xe8] sm:$0xff] %vm533, %v506
      %563 = vst [vmem:[%s237 + $0xf0] sm:$0xff] %v510
      %564 = vst.msk [vmem:[%s237 + $0xf8] sm:$0xff] %vm533, %v512
      %565 = vst [vmem:[%s237 + $0x100] sm:$0xff] %v516
      %566 = vst.msk [vmem:[%s237 + $0x108] sm:$0xff] %vm533, %v518
      %567 = vst [vmem:[%s237 + $0x110] sm:$0xff] %v522
      %568 = vst.msk [vmem:[%s237 + $0x118] sm:$0xff] %vm533, %v524
      %569 = vst [vmem:[%s237 + $0x120] sm:$0xff] %v528
      %570 = vst.msk [vmem:[%s237 + $0x128] sm:$0xff] %vm533, %v530
      %s571 = smul.u32 19, %s19
      %s572 = smul.u32 2, %s18
      %p573 = scmp.lt.s32.totalorder %s571, 37
      %s574 = scalar_select %p573, %s571, 37
      %p575 = scmp.lt.s32.totalorder %s572, 1
      %s576 = scalar_select %p575, %s572, 1
      %s577 = smul.addr %s574, 2
      %s578 = sadd.s32 %s576, %s577
      %s579 = smul.addr %s578, 8
      %s580 = scalar_lea.vmem %s3, %s579
      // Predicated region
      $region33: #{tpu_custom_call.1} parent=31 // pred_check
        %p581 = pneg %p124
      $region34: #{tpu_custom_call.1} parent=31 // pred_check_branch
        %583 = sbr.rel (%p581) target = $region36
      $region35: #{tpu_custom_call.1} parent=31 // pred_region
        %s584 = smul.u32 19, %s19
        %s585 = smul.u32 2, %s18
      $region36: #{tpu_custom_call.1} parent=31 // pred_fallthru
        _
    $region32: #{tpu_custom_call.1} parent=5 // pred_fallthru
      _
    %p586 = scmp.le.s32.totalorder 2, %s9
    // Predicated region
    $region37: #{tpu_custom_call.1} parent=5 // pred_check
      %p587 = pneg %p586
    $region38: #{tpu_custom_call.1} parent=5 // pred_check_branch
      %589 = sbr.rel (%p587) target = $region40
    $region39: #{tpu_custom_call.1} parent=5 // pred_region
      %s590 = ssub.s32 %s9, 2
      // Predicated region
      $region41: #{tpu_custom_call.1} parent=39 // pred_check
        %p591 = pneg %p130
      $region42: #{tpu_custom_call.1} parent=39 // pred_check_branch
        %593 = sbr.rel (%p591) target = $region44
      $region43: #{tpu_custom_call.1} parent=39 // pred_region
        %s594 = smul.u32 19, %s21
        %s595 = smul.u32 2, %s20
        %p596 = scmp.lt.s32.totalorder %s594, 37
        %s597 = scalar_select %p596, %s594, 37
        %p598 = scmp.lt.s32.totalorder %s595, 1
        %s599 = scalar_select %p598, %s595, 1
        %s600 = smul.addr %s597, 2
        %s601 = sadd.s32 %s599, %s600
        %s602 = smul.addr %s601, 8
        %s603 = scalar_lea.vmem %s3, %s602
      $region44: #{tpu_custom_call.1} parent=39 // pred_fallthru
        _
    $region40: #{tpu_custom_call.1} parent=5 // pred_fallthru
      _
  $region6: #{tpu_custom_call.1} parent=0 // loop_footer
    %s13 = sadd.s32 1, %s9
  $region7: #{tpu_custom_call.1} parent=0 // loop_footer_branch
    %8 = sbr.rel target = $region3
  $region8: #{tpu_custom_call.1} parent=0 // loop_exit
    _

</llo_original>
